<compile_context>
chip_gen: v6e
topology: v6e:2x2x1
jax: 0.10.0
libtpu: 0.0.40
codegen_flags: <defaults>
</compile_context>

<pallas_src>
import functools

import jax
import jax.numpy as jnp
from jax import lax
from jax.experimental import pallas as pl
from jax.experimental.pallas import tpu as pltpu


def _vq_kernel(x_ref, e_ref, et_ref, e2_ref, quant_ref, sse_ref, *, hw, tile_t):
    """One tile of tokens (lanes) vs. the full codebook (sublanes).

    x_ref:     (1, C, T)  channel-major latent tile (tokens in lanes)
    e_ref:     (K, C)     embedding table
    et_ref:    (C, K)     embedding table, pre-transposed in the wrapper
    e2_ref:    (K, 1)     precomputed ||e_k||^2
    quant_ref: (1, C, T)  nearest-codebook vectors for this tile
    sse_ref:   (1,1,1,128) per-tile partial sum of squared error (lane 0)
    """
    t = pl.program_id(1)

    x = x_ref[0].astype(jnp.float32)          # (C, T)
    e = e_ref[...].astype(jnp.float32)        # (K, C)
    e_t = et_ref[...].astype(jnp.float32)     # (C, K)
    e2 = e2_ref[...]                          # (K, 1)
    k = e.shape[0]

    # argmin_k ||x - e_k||^2 == argmin_k (||e_k||^2 - 2 e_k . x); the ||x||^2
    # term is constant per token (lane) so it is dropped from the ranking.
    score = e2 - 2.0 * jnp.dot(e, x, preferred_element_type=jnp.float32)  # (K, T)

    # First-occurrence argmin along the K (sublane) axis == torch.argmin ties.
    k_iota = lax.broadcasted_iota(jnp.int32, score.shape, 0)              # (K, T)
    min_s = jnp.min(score, axis=0, keepdims=True)                         # (1, T)
    idx = jnp.min(jnp.where(score <= min_s, k_iota, k), axis=0, keepdims=True)

    # Gather via one-hot matmul (MXU friendly): quant^T = E^T @ onehot.
    onehot = (k_iota == idx).astype(jnp.float32)                          # (K, T)
    quant = jnp.dot(e_t, onehot, preferred_element_type=jnp.float32)      # (C, T)
    quant_ref[0] = quant.astype(quant_ref.dtype)

    # Per-tile partial SSE (masked on a ragged last tile).
    diff = x - quant
    sq = diff * diff
    if hw % tile_t != 0:  # static (trace-time) branch
        tok = lax.broadcasted_iota(jnp.int32, (1, tile_t), 1) + t * tile_t
        sq = jnp.where(tok < hw, sq, 0.0)
    partial = jnp.sum(sq)

    lane = lax.broadcasted_iota(jnp.int32, sse_ref.shape, 3)
    sse_ref[...] = jnp.where(lane == 0, partial, 0.0)


@functools.partial(jax.jit, static_argnames=("commitment_weight", "tile_t"))
def vector_quantizer_forward(z, embedding, commitment_weight, tile_t=2048):
    """Pallas implementation of VectorQuantizer.forward.

    z:         (N, C, H, W) float32  (NCHW, matching the PyTorch module)
    embedding: (K, C)       float32
    returns (quant_z_nchw, vq_loss, commit_loss)
    """
    N, C, H, W = z.shape
    K, C_e = embedding.shape
    assert C == C_e, "latent_dim mismatch"
    HW = H * W

    # Token tile: as large as possible, clamped to HW; ragged tails via cdiv.
    tile_t = int(min(tile_t, HW))
    grid_t = -(-HW // tile_t)  # cdiv
    grid = (N, grid_t)

    # Channel-major view: pure reshape, no HBM transpose traffic.
    z_r = z.reshape(N, C, HW)
    e = embedding.astype(jnp.float32)
    e_t = e.T                                       # tiny (C, K), done once
    e2 = jnp.sum(e * e, axis=1, keepdims=True)      # (K, 1), hoisted out of grid

    kernel = functools.partial(_vq_kernel, hw=HW, tile_t=tile_t)

    quant_r, sse_partials = pl.pallas_call(
        kernel,
        out_shape=(
            jax.ShapeDtypeStruct((N, C, HW), z.dtype),
            jax.ShapeDtypeStruct((N, grid_t, 1, 128), jnp.float32),
        ),
        grid_spec=pltpu.PrefetchScalarGridSpec(
            num_scalar_prefetch=0,
            grid=grid,
            in_specs=[
                pl.BlockSpec((1, C, tile_t), lambda n, t: (n, 0, t)),
                pl.BlockSpec((K, C), lambda n, t: (0, 0)),
                pl.BlockSpec((C, K), lambda n, t: (0, 0)),
                pl.BlockSpec((K, 1), lambda n, t: (0, 0)),
            ],
            out_specs=[
                pl.BlockSpec((1, C, tile_t), lambda n, t: (n, 0, t)),
                pl.BlockSpec((1, 1, 1, 128), lambda n, t: (n, t, 0, 0)),
            ],
        ),
        compiler_params=pltpu.CompilerParams(
            # No resident accumulators -> both axes parallel (v7x megacore).
            dimension_semantics=("parallel", "parallel"),
            # Explicit scoped-VMEM budget so large token tiles also pipeline
            # cleanly on v5e (16 MiB default) without shrinking buffering.
            vmem_limit_bytes=32 * 1024 * 1024,
        ),
    )(z_r, e, e_t, e2)

    M = N * HW
    mse = jnp.sum(sse_partials) / jnp.float32(M * C)
    vq_loss = mse                                        # F.mse_loss(z.detach(), quant)
    commit_loss = jnp.float32(commitment_weight) * mse   # w * F.mse_loss(z, quant.detach())

    quant_z = quant_r.reshape(N, C, H, W)                # free reshape back to NCHW
    return quant_z, vq_loss, commit_loss


def _reference(z, embedding, commitment_weight):
    N, C, H, W = z.shape
    x = jnp.transpose(z.reshape(N, C, H * W), (0, 2, 1)).reshape(-1, C)
    d2 = (
        jnp.sum(x * x, axis=1, keepdims=True)
        - 2.0 * x @ embedding.T
        + jnp.sum(embedding * embedding, axis=1)[None, :]
    )
    idx = jnp.argmin(d2, axis=1)
    quant = embedding[idx]
    mse = jnp.mean((x - quant) ** 2)
    quant_z = jnp.transpose(quant.reshape(N, H, W, C), (0, 3, 1, 2))
    return quant_z, mse, commitment_weight * mse


if __name__ == "__main__":
    num_embeddings = 64
    latent_dim = 4
    commitment_weight = 0.25

    key = jax.random.PRNGKey(0)
    k_emb, k_z = jax.random.split(key)

    # Deterministic parameter init matching torch's uniform_(-1/K, 1/K)
    embedding = jax.random.uniform(
        k_emb, (num_embeddings, latent_dim),
        minval=-1.0 / num_embeddings, maxval=1.0 / num_embeddings,
        dtype=jnp.float32,
    )

    # Small NCHW input: batch=2, channels=latent_dim=4, spatial=16x16
    z = jax.random.normal(k_z, (2, latent_dim, 16, 16), dtype=jnp.float32)

    quant_z, vq_loss, commit_loss = vector_quantizer_forward(
        z, embedding, commitment_weight=commitment_weight
    )
    jax.block_until_ready((quant_z, vq_loss, commit_loss))

    # Light correctness check against a pure-JAX reference.
    ref_q, ref_vq, ref_commit = _reference(z, embedding, commitment_weight)
    assert quant_z.shape == z.shape
    assert jnp.allclose(quant_z, ref_q, atol=1e-5)
    assert jnp.allclose(vq_loss, ref_vq, atol=1e-6)
    assert jnp.allclose(commit_loss, ref_commit, atol=1e-6)

    print("KERNEL_OK")
</pallas_src>

<mosaic_0001>
module attributes {stable_mosaic.version = 11 : i64} {
  func.func @_vq_kernel(%arg0: i32, %arg1: i32, %arg2: memref<1x4x256xf32, #tpu.memory_space<vmem>>, %arg3: memref<64x4xf32, #tpu.memory_space<vmem>>, %arg4: memref<4x64xf32, #tpu.memory_space<vmem>>, %arg5: memref<64x1xf32, #tpu.memory_space<vmem>>, %arg6: memref<1x4x256xf32, #tpu.memory_space<vmem>>, %arg7: memref<1x1x1x128xf32, #tpu.memory_space<vmem>>) attributes {dimension_semantics = [#tpu.dimension_semantics<parallel>, #tpu.dimension_semantics<parallel>], iteration_bounds = array<i64: 2, 1>, scalar_prefetch = 0 : i64, scratch_operands = 0 : i64, tpu.core_type = #tpu.core_type<tc>, window_params = [{transform_indices = @transform_0, window_bounds = array<i64: 1, 4, 256>}, {pipeline_mode = #tpu.pipeline_mode<synchronous>, transform_indices = @transform_1, window_bounds = array<i64: 64, 4>}, {pipeline_mode = #tpu.pipeline_mode<synchronous>, transform_indices = @transform_2, window_bounds = array<i64: 4, 64>}, {pipeline_mode = #tpu.pipeline_mode<synchronous>, transform_indices = @transform_3, window_bounds = array<i64: 64, 1>}, {transform_indices = @transform_4, window_bounds = array<i64: 1, 4, 256>}, {transform_indices = @transform_5, window_bounds = array<i64: 1, 1, 1, 128>}]} {
    %c0 = arith.constant 0 : index
    %c0_0 = arith.constant 0 : index
    %c0_1 = arith.constant 0 : index
    %0 = vector.load %arg2[%c0, %c0_0, %c0_1] : memref<1x4x256xf32, #tpu.memory_space<vmem>>, vector<1x4x256xf32>
    %1 = vector.shape_cast %0 : vector<1x4x256xf32> to vector<4x256xf32>
    %c0_2 = arith.constant 0 : index
    %c0_3 = arith.constant 0 : index
    %2 = vector.load %arg3[%c0_2, %c0_3] : memref<64x4xf32, #tpu.memory_space<vmem>>, vector<64x4xf32>
    %c0_4 = arith.constant 0 : index
    %c0_5 = arith.constant 0 : index
    %3 = vector.load %arg4[%c0_4, %c0_5] : memref<4x64xf32, #tpu.memory_space<vmem>>, vector<4x64xf32>
    %c0_6 = arith.constant 0 : index
    %c0_7 = arith.constant 0 : index
    %4 = vector.load %arg5[%c0_6, %c0_7] : memref<64x1xf32, #tpu.memory_space<vmem>>, vector<64x1xf32>
    %cst = arith.constant dense<0.000000e+00> : vector<64x256xf32>
    %5 = tpu.matmul %2, %1, %cst {dimension_numbers = #tpu.dot_dimension_numbers<[1], [0], [0], [1], [0, 0, 1, 1], [], []>} : vector<64x4xf32>, vector<4x256xf32>, vector<64x256xf32> -> vector<64x256xf32>
    %cst_8 = arith.constant 2.000000e+00 : f32
    %6 = vector.broadcast %cst_8 : f32 to vector<64x256xf32>
    %7 = arith.mulf %6, %5 : vector<64x256xf32>
    %8 = vector.broadcast %4 : vector<64x1xf32> to vector<64x256xf32>
    %9 = arith.subf %8, %7 : vector<64x256xf32>
    %10 = tpu.iota {dimensions = array<i32: 0>} : vector<64x256xi32>
    %cst_9 = arith.constant dense<0x7F800000> : vector<256xf32>
    %11 = vector.multi_reduction <minimumf>, %9, %cst_9 [0] : vector<64x256xf32> to vector<256xf32>
    %12 = vector.shape_cast %11 : vector<256xf32> to vector<1x256xf32>
    %13 = vector.broadcast %12 : vector<1x256xf32> to vector<64x256xf32>
    %14 = arith.cmpf ole, %9, %13 : vector<64x256xf32>
    %c64_i32 = arith.constant 64 : i32
    %15 = vector.broadcast %c64_i32 : i32 to vector<64x256xi32>
    %16 = arith.select %14, %10, %15 : vector<64x256xi1>, vector<64x256xi32>
    %cst_10 = arith.constant dense<2147483647> : vector<256xi32>
    %17 = vector.multi_reduction <minsi>, %16, %cst_10 [0] : vector<64x256xi32> to vector<256xi32>
    %18 = vector.shape_cast %17 : vector<256xi32> to vector<1x256xi32>
    %19 = vector.broadcast %18 : vector<1x256xi32> to vector<64x256xi32>
    %20 = arith.cmpi eq, %10, %19 : vector<64x256xi32>
    %21 = arith.extui %20 : vector<64x256xi1> to vector<64x256xi32>
    %22 = arith.sitofp %21 : vector<64x256xi32> to vector<64x256xf32>
    %cst_11 = arith.constant dense<0.000000e+00> : vector<4x256xf32>
    %23 = tpu.matmul %3, %22, %cst_11 {dimension_numbers = #tpu.dot_dimension_numbers<[1], [0], [0], [1], [0, 0, 1, 1], [], []>} : vector<4x64xf32>, vector<64x256xf32>, vector<4x256xf32> -> vector<4x256xf32>
    %c0_12 = arith.constant 0 : index
    %c0_13 = arith.constant 0 : index
    %c0_14 = arith.constant 0 : index
    %24 = vector.load %arg6[%c0_12, %c0_13, %c0_14] : memref<1x4x256xf32, #tpu.memory_space<vmem>>, vector<1x4x256xf32>
    %25 = vector.shape_cast %24 : vector<1x4x256xf32> to vector<4x256xf32>
    %26 = vector.shape_cast %23 : vector<4x256xf32> to vector<1x4x256xf32>
    tpu.vector_store %arg6[%c0_12, %c0_13, %c0_14], %26 {strides = array<i32>} : memref<1x4x256xf32, #tpu.memory_space<vmem>>, vector<1x4x256xf32>,
    %27 = arith.subf %1, %23 : vector<4x256xf32>
    %28 = arith.mulf %27, %27 : vector<4x256xf32>
    %29 = vector.shape_cast %28 : vector<4x256xf32> to vector<1x4x256xf32>
    %cst_15 = arith.constant dense<0.000000e+00> : vector<1xf32>
    %30 = vector.multi_reduction <add>, %29, %cst_15 [1, 2] : vector<1x4x256xf32> to vector<1xf32>
    %31 = vector.shape_cast %30 : vector<1xf32> to vector<1x1x1xf32>
    %32 = vector.extract %31[0, 0, 0] : f32 from vector<1x1x1xf32>
    %33 = tpu.iota {dimensions = array<i32: 3>} : vector<1x1x1x128xi32>
    %c0_i32 = arith.constant 0 : i32
    %34 = vector.broadcast %c0_i32 : i32 to vector<1x1x1x128xi32>
    %35 = arith.cmpi eq, %33, %34 : vector<1x1x1x128xi32>
    %cst_16 = arith.constant 0.000000e+00 : f32
    %36 = vector.broadcast %32 : f32 to vector<1x1x1x128xf32>
    %37 = vector.broadcast %cst_16 : f32 to vector<1x1x1x128xf32>
    %38 = arith.select %35, %36, %37 : vector<1x1x1x128xi1>, vector<1x1x1x128xf32>
    %c0_17 = arith.constant 0 : index
    %c0_18 = arith.constant 0 : index
    %c0_19 = arith.constant 0 : index
    %c0_20 = arith.constant 0 : index
    %39 = vector.load %arg7[%c0_17, %c0_18, %c0_19, %c0_20] : memref<1x1x1x128xf32, #tpu.memory_space<vmem>>, vector<1x1x1x128xf32>
    tpu.vector_store %arg7[%c0_17, %c0_18, %c0_19, %c0_20], %38 {strides = array<i32>} : memref<1x1x1x128xf32, #tpu.memory_space<vmem>>, vector<1x1x1x128xf32>,
    return
  }
  func.func @transform_0(%arg0: i32, %arg1: i32) -> (i32, i32, i32) {
    %c0_i32 = arith.constant 0 : i32
    %c0_i32_0 = arith.constant 0 : i32
    return %arg0, %c0_i32, %arg1 : i32, i32, i32
  }
  func.func @transform_1(%arg0: i32, %arg1: i32) -> (i32, i32) {
    %c0_i32 = arith.constant 0 : i32
    %c0_i32_0 = arith.constant 0 : i32
    %c0_i32_1 = arith.constant 0 : i32
    return %c0_i32, %c0_i32_0 : i32, i32
  }
  func.func @transform_2(%arg0: i32, %arg1: i32) -> (i32, i32) {
    %c0_i32 = arith.constant 0 : i32
    %c0_i32_0 = arith.constant 0 : i32
    %c0_i32_1 = arith.constant 0 : i32
    return %c0_i32, %c0_i32_0 : i32, i32
  }
  func.func @transform_3(%arg0: i32, %arg1: i32) -> (i32, i32) {
    %c0_i32 = arith.constant 0 : i32
    %c0_i32_0 = arith.constant 0 : i32
    %c0_i32_1 = arith.constant 0 : i32
    return %c0_i32, %c0_i32_0 : i32, i32
  }
  func.func @transform_4(%arg0: i32, %arg1: i32) -> (i32, i32, i32) {
    %c0_i32 = arith.constant 0 : i32
    %c0_i32_0 = arith.constant 0 : i32
    return %arg0, %c0_i32, %arg1 : i32, i32, i32
  }
  func.func @transform_5(%arg0: i32, %arg1: i32) -> (i32, i32, i32, i32) {
    %c0_i32 = arith.constant 0 : i32
    %c0_i32_0 = arith.constant 0 : i32
    %c0_i32_1 = arith.constant 0 : i32
    return %arg0, %arg1, %c0_i32, %c0_i32_0 : i32, i32, i32, i32
  }
}

</mosaic_0001>

<llo_original>
// kernel: vector_quantizer_forward.1
$region0: #{vector_quantizer_forward.1}
  #allocation0 [shape = 'u32[]', space=smem, size = 0x4, offset = 0x4, fixed_abs, tag = 'smem constant byte address 0x4 - core index']
  #allocation1 [shape = 'u32[144,128]{1,0:T(1,128)}', space=vmem, size = 0x12000, scoped, tag = 'internal scratch']
  %s0 = inlined_call_operand.vmem [shape: f32[2,4,256], index: 0, kind: input, shape index: {}]
  %s1 = inlined_call_operand.vmem [shape: f32[64,4], index: 1, kind: input, shape index: {}]
  %s2 = inlined_call_operand.vmem [shape: f32[4,64], index: 2, kind: input, shape index: {}]
  %s3 = inlined_call_operand.vmem [shape: f32[64,1], index: 3, kind: input, shape index: {}]
  %s4 = inlined_call_operand.vmem [shape: f32[2,4,256], index: 4, kind: output, shape index: {0}]
  %s5 = inlined_call_operand.vmem [shape: f32[2,1,1,128], index: 5, kind: output, shape index: {1}]
  %6 = xla_tuple %s4, %s5
  %s7 = sld [smem:[#allocation0]]
  $region57: #{vector_quantizer_forward.1} parent=0
    _
  %s9 = ssub.s32 1, %s7
  %s10 = scalar_select 0, %s9, %s7
  loop: start=0, step=1, limit=4
  $region2: #{vector_quantizer_forward.1} parent=0 // loop_pre_header
    _
  $region3: #{vector_quantizer_forward.1} parent=0 // loop_header
    %s12 = sphi 0, %s16
    %p13 = scmp.ge.s32.totalorder %s12, 4
    %s19 = sphi 0, %s31
    %s20 = sphi 0, %s27
    %s21 = sphi 0, %s19
    %s22 = sphi 0, %s20
    %s23 = sphi 0, %s21
    %s24 = sphi 0, %s22
    %s36 = sphi 0, %s38
    %s39 = sphi 0, %s36
    %s40 = sphi 0, %s39
    %s56 = sphi 0, %s40
    %s60 = sphi 0, %s60
    %s62 = sphi 0, %s60
    %s63 = sphi 0, %s62
    %s77 = sphi 0, %s63
    %s81 = sphi 0, %s81
    %s83 = sphi 0, %s81
    %s84 = sphi 0, %s83
    %s98 = sphi 0, %s84
    %s102 = sphi 0, %s102
    %s104 = sphi 0, %s102
    %s105 = sphi 0, %s104
    %s119 = sphi 0, %s105
    %s127 = sphi 0, %s129
    %s130 = sphi 0, %s127
    %s131 = sphi 0, %s130
    %s147 = sphi 0, %s131
    %s155 = sphi 0, %s157
    %s158 = sphi 0, %s155
    %s159 = sphi 0, %s158
    %s175 = sphi 0, %s159
  $region4: #{vector_quantizer_forward.1} parent=0 // loop_header_branch
    %15 = sbr.rel (%p13) target = $region8
  $region5: #{vector_quantizer_forward.1} parent=0 // loop_body
    %s17 = ssub.s32 %s12, 1
    %s18 = ssub.s32 %s12, 2
    %s25 = sadd.s32 1, %s20
    %p26 = scmp.ge.s32.totalorder %s25, 1
    %s27 = scalar_select %p26, 0, %s25
    %s28 = sadd.s32 1, %s19
    %s29 = scalar_select %p26, %s28, %s19
    %p30 = scmp.ge.s32.totalorder %s29, 2
    %s31 = scalar_select %p30, 0, %s29
    %s32 = ssub.s32 %s19, %s31
    %s33 = ssub.s32 %s20, %s27
    %s34 = sor.u32 %s32, %s33
    %p35 = scmp.eq.s32.totalorder %s34, 0
    %s37 = sadd.s32 %s36, 1
    %s38 = scalar_select %p35, %s36, %s37
    %p41 = pneg %p35
    %p42 = scmp.eq.s32.totalorder %s12, 1
    %p43 = por %p41, %p42
    %p44 = scmp.ne.s32.totalorder %s36, %s39
    %p45 = scmp.eq.s32.totalorder %s12, 0
    %p46 = por %p44, %p45
    %p47 = scmp.ne.s32.totalorder %s36, %s39
    %p48 = scmp.eq.s32.totalorder %s17, 1
    %p49 = por %p47, %p48
    %p50 = scmp.ne.s32.totalorder %s39, %s40
    %p51 = scmp.eq.s32.totalorder %s17, 0
    %p52 = por %p50, %p51
    %p53 = scmp.ne.s32.totalorder %s39, %s40
    %p54 = scmp.eq.s32.totalorder %s18, 1
    %p55 = por %p53, %p54
    %p57 = scmp.ne.s32.totalorder %s40, %s56
    %p58 = scmp.eq.s32.totalorder %s18, 0
    %p59 = por %p57, %p58
    %s61 = sadd.s32 %s60, 1
    %p64 = scmp.eq.s32.totalorder %s12, 1
    %p65 = scmp.ne.s32.totalorder %s60, %s62
    %p66 = scmp.eq.s32.totalorder %s12, 0
    %p67 = por %p65, %p66
    %p68 = scmp.ne.s32.totalorder %s60, %s62
    %p69 = scmp.eq.s32.totalorder %s17, 1
    %p70 = por %p68, %p69
    %p71 = scmp.ne.s32.totalorder %s62, %s63
    %p72 = scmp.eq.s32.totalorder %s17, 0
    %p73 = por %p71, %p72
    %p74 = scmp.ne.s32.totalorder %s62, %s63
    %p75 = scmp.eq.s32.totalorder %s18, 1
    %p76 = por %p74, %p75
    %p78 = scmp.ne.s32.totalorder %s63, %s77
    %p79 = scmp.eq.s32.totalorder %s18, 0
    %p80 = por %p78, %p79
    %s82 = sadd.s32 %s81, 1
    %p85 = scmp.eq.s32.totalorder %s12, 1
    %p86 = scmp.ne.s32.totalorder %s81, %s83
    %p87 = scmp.eq.s32.totalorder %s12, 0
    %p88 = por %p86, %p87
    %p89 = scmp.ne.s32.totalorder %s81, %s83
    %p90 = scmp.eq.s32.totalorder %s17, 1
    %p91 = por %p89, %p90
    %p92 = scmp.ne.s32.totalorder %s83, %s84
    %p93 = scmp.eq.s32.totalorder %s17, 0
    %p94 = por %p92, %p93
    %p95 = scmp.ne.s32.totalorder %s83, %s84
    %p96 = scmp.eq.s32.totalorder %s18, 1
    %p97 = por %p95, %p96
    %p99 = scmp.ne.s32.totalorder %s84, %s98
    %p100 = scmp.eq.s32.totalorder %s18, 0
    %p101 = por %p99, %p100
    %s103 = sadd.s32 %s102, 1
    %p106 = scmp.eq.s32.totalorder %s12, 1
    %p107 = scmp.ne.s32.totalorder %s102, %s104
    %p108 = scmp.eq.s32.totalorder %s12, 0
    %p109 = por %p107, %p108
    %p110 = scmp.ne.s32.totalorder %s102, %s104
    %p111 = scmp.eq.s32.totalorder %s17, 1
    %p112 = por %p110, %p111
    %p113 = scmp.ne.s32.totalorder %s104, %s105
    %p114 = scmp.eq.s32.totalorder %s17, 0
    %p115 = por %p113, %p114
    %p116 = scmp.ne.s32.totalorder %s104, %s105
    %p117 = scmp.eq.s32.totalorder %s18, 1
    %p118 = por %p116, %p117
    %p120 = scmp.ne.s32.totalorder %s105, %s119
    %p121 = scmp.eq.s32.totalorder %s18, 0
    %p122 = por %p120, %p121
    %s123 = ssub.s32 %s19, %s31
    %s124 = ssub.s32 %s20, %s27
    %s125 = sor.u32 %s123, %s124
    %p126 = scmp.eq.s32.totalorder %s125, 0
    %s128 = sadd.s32 %s127, 1
    %s129 = scalar_select %p126, %s127, %s128
    %p132 = pneg %p126
    %p133 = scmp.eq.s32.totalorder %s12, 1
    %p134 = por %p132, %p133
    %p135 = scmp.ne.s32.totalorder %s127, %s130
    %p136 = scmp.eq.s32.totalorder %s12, 0
    %p137 = por %p135, %p136
    %p138 = scmp.ne.s32.totalorder %s127, %s130
    %p139 = scmp.eq.s32.totalorder %s17, 1
    %p140 = por %p138, %p139
    %p141 = scmp.ne.s32.totalorder %s130, %s131
    %p142 = scmp.eq.s32.totalorder %s17, 0
    %p143 = por %p141, %p142
    %p144 = scmp.ne.s32.totalorder %s130, %s131
    %p145 = scmp.eq.s32.totalorder %s18, 1
    %p146 = por %p144, %p145
    %p148 = scmp.ne.s32.totalorder %s131, %s147
    %p149 = scmp.eq.s32.totalorder %s18, 0
    %p150 = por %p148, %p149
    %s151 = ssub.s32 %s19, %s31
    %s152 = ssub.s32 %s20, %s27
    %s153 = sor.u32 %s151, %s152
    %p154 = scmp.eq.s32.totalorder %s153, 0
    %s156 = sadd.s32 %s155, 1
    %s157 = scalar_select %p154, %s155, %s156
    %p160 = pneg %p154
    %p161 = scmp.eq.s32.totalorder %s12, 1
    %p162 = por %p160, %p161
    %p163 = scmp.ne.s32.totalorder %s155, %s158
    %p164 = scmp.eq.s32.totalorder %s12, 0
    %p165 = por %p163, %p164
    %p166 = scmp.ne.s32.totalorder %s155, %s158
    %p167 = scmp.eq.s32.totalorder %s17, 1
    %p168 = por %p166, %p167
    %p169 = scmp.ne.s32.totalorder %s158, %s159
    %p170 = scmp.eq.s32.totalorder %s17, 0
    %p171 = por %p169, %p170
    %p172 = scmp.ne.s32.totalorder %s158, %s159
    %p173 = scmp.eq.s32.totalorder %s18, 1
    %p174 = por %p172, %p173
    %p176 = scmp.ne.s32.totalorder %s159, %s175
    %p177 = scmp.eq.s32.totalorder %s18, 0
    %p178 = por %p176, %p177
    %p179 = scmp.le.s32.totalorder 1, %s12
    %p180 = scmp.lt.s32.totalorder %s12, 3
    %p181 = pnand %p179, %p180
    %p182 = pneg %p181
    // Predicated region
    $region9: #{vector_quantizer_forward.1} parent=5 // pred_check
      _
    $region10: #{vector_quantizer_forward.1} parent=5 // pred_check_branch
      %184 = sbr.rel (%p181) target = $region12
    $region11: #{vector_quantizer_forward.1} parent=5 // pred_region
      %s185 = ssub.s32 %s12, 1
      // Predicated region
      $region13: #{vector_quantizer_forward.1} parent=11 // pred_check
        %p186 = pneg %p73
      $region14: #{vector_quantizer_forward.1} parent=11 // pred_check_branch
        %188 = sbr.rel (%p186) target = $region16
      $region15: #{vector_quantizer_forward.1} parent=11 // pred_region
        _
      $region16: #{vector_quantizer_forward.1} parent=11 // pred_fallthru
        _
      // Predicated region
      $region17: #{vector_quantizer_forward.1} parent=11 // pred_check
        %p189 = pneg %p94
      $region18: #{vector_quantizer_forward.1} parent=11 // pred_check_branch
        %191 = sbr.rel (%p189) target = $region20
      $region19: #{vector_quantizer_forward.1} parent=11 // pred_region
        _
      $region20: #{vector_quantizer_forward.1} parent=11 // pred_fallthru
        _
      // Predicated region
      $region21: #{vector_quantizer_forward.1} parent=11 // pred_check
        %p192 = pneg %p115
      $region22: #{vector_quantizer_forward.1} parent=11 // pred_check_branch
        %194 = sbr.rel (%p192) target = $region24
      $region23: #{vector_quantizer_forward.1} parent=11 // pred_region
        _
      $region24: #{vector_quantizer_forward.1} parent=11 // pred_fallthru
        _
    $region12: #{vector_quantizer_forward.1} parent=5 // pred_fallthru
      _
    %p195 = scmp.lt.s32.totalorder %s12, 2
    // Predicated region
    $region25: #{vector_quantizer_forward.1} parent=5 // pred_check
      %p196 = pneg %p195
    $region26: #{vector_quantizer_forward.1} parent=5 // pred_check_branch
      %198 = sbr.rel (%p196) target = $region28
    $region27: #{vector_quantizer_forward.1} parent=5 // pred_region
      // Predicated region
      $region29: #{vector_quantizer_forward.1} parent=27 // pred_check
        %p199 = pneg %p46
      $region30: #{vector_quantizer_forward.1} parent=27 // pred_check_branch
        %201 = sbr.rel (%p199) target = $region32
      $region31: #{vector_quantizer_forward.1} parent=27 // pred_region
        %s202 = smul.u32 2, %s20
        %p203 = scmp.lt.s32.totalorder %s19, 1
        %s204 = scalar_select %p203, %s19, 1
        %p205 = scmp.lt.s32.totalorder %s202, 1
        %s206 = scalar_select %p205, %s202, 1
        %s207 = smul.addr %s204, 2
        %s208 = sadd.s32 %s206, %s207
        %s209 = smul.addr %s208, 4
        %s210 = scalar_lea.vmem %s0, %s209
        %s211 = smul.u32 2, %s20
      $region32: #{vector_quantizer_forward.1} parent=27 // pred_fallthru
        _
    $region28: #{vector_quantizer_forward.1} parent=5 // pred_fallthru
      _
    %p212 = scmp.le.s32.totalorder 1, %s12
    %p213 = scmp.lt.s32.totalorder %s12, 3
    %p214 = pnand %p212, %p213
    %p215 = pneg %p214
    // Predicated region
    $region33: #{vector_quantizer_forward.1} parent=5 // pred_check
      _
    $region34: #{vector_quantizer_forward.1} parent=5 // pred_check_branch
      %217 = sbr.rel (%p214) target = $region36
    $region35: #{vector_quantizer_forward.1} parent=5 // pred_region
      %s218 = ssub.s32 %s12, 1
      %s219 = smul.u32 2, %s22
      %p220 = scmp.lt.s32.totalorder %s21, 1
      %s221 = scalar_select %p220, %s21, 1
      %p222 = scmp.lt.s32.totalorder %s219, 1
      %s223 = scalar_select %p222, %s219, 1
      %s224 = smul.addr %s221, 2
      %s225 = sadd.s32 %s223, %s224
      %s226 = smul.addr %s225, 4
      %s227 = scalar_lea.vmem %s0, %s226
      %p228 = pneg %p52
      %p229 = pneg %p49
      %p230 = pneg %p73
      %p231 = pneg %p70
      %p232 = pneg %p94
      %p233 = pneg %p91
      %p234 = pneg %p115
      %p235 = pneg %p112
      %p236 = pneg %p143
      %p237 = pneg %p140
      %s238 = smul.u32 2, %s22
      %p239 = scmp.lt.s32.totalorder %s21, 1
      %s240 = scalar_select %p239, %s21, 1
      %p241 = scmp.lt.s32.totalorder %s238, 1
      %s242 = scalar_select %p241, %s238, 1
      %s243 = smul.addr %s240, 2
      %s244 = sadd.s32 %s242, %s243
      %s245 = smul.addr %s244, 4
      %s246 = scalar_lea.vmem %s4, %s245
      %p247 = pneg %p171
      %p248 = pneg %p168
      %p249 = scmp.lt.s32.totalorder %s21, 1
      %s250 = scalar_select %p249, %s21, 1
      %p251 = scmp.lt.s32.totalorder %s22, 0
      %s252 = scalar_select %p251, %s22, 0
      %s253 = sadd.s32 %s252, %s250
      %s254 = scalar_lea.vmem %s5, %s253
      %s255 = smul.u32 2, %s22
      %p256 = scmp.lt.s32.totalorder %s21, 1
      %s257 = scalar_select %p256, %s21, 1
      %p258 = scmp.lt.s32.totalorder %s255, 1
      %s259 = scalar_select %p258, %s255, 1
      %s260 = smul.addr %s257, 2
      %s261 = sadd.s32 %s259, %s260
      %s262 = smul.addr %s261, 4
      %s263 = scalar_lea.vmem %s0, %s262
      %s264 = smul.u32 2, %s22
      %s265 = smul.u32 2, %s22
      %p266 = scmp.lt.s32.totalorder %s21, 1
      %s267 = scalar_select %p266, %s21, 1
      %p268 = scmp.lt.s32.totalorder %s265, 1
      %s269 = scalar_select %p268, %s265, 1
      %s270 = smul.addr %s267, 2
      %s271 = sadd.s32 %s269, %s270
      %s272 = smul.addr %s271, 4
      %s273 = scalar_lea.vmem %s4, %s272
      %s274 = smul.u32 2, %s22
      %p275 = scmp.lt.s32.totalorder %s21, 1
      %s276 = scalar_select %p275, %s21, 1
      %p277 = scmp.lt.s32.totalorder %s22, 0
      %s278 = scalar_select %p277, %s22, 0
      %s279 = sadd.s32 %s278, %s276
      %s280 = scalar_lea.vmem %s5, %s279
      %v281 = vld [vmem:[%s263] sm:$0xff]
      %v282 = vld [vmem:[%s1] sm:$0xff]
      %v283 = vld [vmem:[%s1 + $0x8] sm:$0xff]
      %v284 = vld [vmem:[%s1 + $0x10] sm:$0xff]
      %v285 = vld [vmem:[%s1 + $0x18] sm:$0xff]
      %v286 = vld [vmem:[%s1 + $0x20] sm:$0xff]
      %v287 = vld [vmem:[%s1 + $0x28] sm:$0xff]
      %v288 = vld [vmem:[%s1 + $0x30] sm:$0xff]
      %v289 = vld [vmem:[%s1 + $0x38] sm:$0xff]
      %v290 = vld [vmem:[%s2] sm:$0xf]
      %v291 = vld [vmem:[%s3] sm:$0xff]
      %v292 = vld [vmem:[%s3 + $0x8] sm:$0xff]
      %v293 = vld [vmem:[%s3 + $0x10] sm:$0xff]
      %v294 = vld [vmem:[%s3 + $0x18] sm:$0xff]
      %v295 = vld [vmem:[%s3 + $0x20] sm:$0xff]
      %v296 = vld [vmem:[%s3 + $0x28] sm:$0xff]
      %v297 = vld [vmem:[%s3 + $0x30] sm:$0xff]
      %v298 = vld [vmem:[%s3 + $0x38] sm:$0xff]
      %v300 = vcombine.high %v281, %v281
      %vm301 = vcmask 31744
      %v303 = vsel %vm301, %v282, 0
      %v306 = vsel %vm301, %v283, 0
      %v309 = vsel %vm301, %v284, 0
      %v312 = vsel %vm301, %v285, 0
      %v315 = vsel %vm301, %v286, 0
      %v318 = vsel %vm301, %v287, 0
      %v321 = vsel %vm301, %v288, 0
      %v324 = vsel %vm301, %v289, 0
      %vm326 = vcmask 1043456
      %v327 = vsel %vm326, %v281, 0
      %v329 = vsel %vm326, %v300, 0
      %331 = vmatprep.subr.mxu0 0.0
      %332 = vmatpush1.msra.mxu0 0.0
      %333 = vmatprep.subr.mxu0 0.0
      %334 = vmatpush1.msra.mxu0 0.0
      %335 = vmatprep.subr.mxu0 0.0
      %336 = vmatpush1.msra.mxu0 0.0
      %337 = vmatprep.subr.mxu0 0.0
      %338 = vmatpush1.msra.mxu0 0.0
      %339 = vmatprep.subr.mxu0 0.0
      %340 = vmatpush1.msra.mxu0 0.0
      %341 = vmatprep.subr.mxu0 0.0
      %342 = vmatpush1.msra.mxu0 0.0
      %343 = vmatprep.subr.mxu0 0.0
      %344 = vmatpush1.msra.mxu0 0.0
      %345 = vmatprep.subr.mxu0 0.0
      %346 = vmatpush1.msra.mxu0 0.0
      %347 = vmatprep.subr.mxu0 0.0
      %348 = vmatpush1.msra.mxu0 0.0
      %349 = vmatprep.subr.mxu0 0.0
      %350 = vmatpush1.msra.mxu0 0.0
      %351 = vmatprep.subr.mxu0 0.0
      %352 = vmatpush1.msra.mxu0 0.0
      %353 = vmatprep.subr.mxu0 0.0
      %354 = vmatpush1.msra.mxu0 0.0
      %355 = vmatprep.subr.mxu0 0.0
      %356 = vmatpush1.msra.mxu0 0.0
      %357 = vmatprep.subr.mxu0 0.0
      %358 = vmatpush1.msra.mxu0 0.0
      %359 = vmatprep.subr.mxu0 0.0
      %360 = vmatpush1.msra.mxu0 0.0
      %361 = vmatprep.subr.mxu0 %v329
      %362 = vmatpush1.msra.mxu0 %v327
      %363 = vmatprep.subr.mxu0 0.0
      %364 = vmatpush2.msra.mxu0 0.0
      %365 = vmatprep.subr.mxu0 0.0
      %366 = vmatpush2.msra.mxu0 0.0
      %367 = vmatprep.subr.mxu0 0.0
      %368 = vmatpush2.msra.mxu0 0.0
      %369 = vmatprep.subr.mxu0 0.0
      %370 = vmatpush2.msra.mxu0 0.0
      %371 = vmatprep.subr.mxu0 0.0
      %372 = vmatpush2.msra.mxu0 0.0
      %373 = vmatprep.subr.mxu0 0.0
      %374 = vmatpush2.msra.mxu0 0.0
      %375 = vmatprep.subr.mxu0 0.0
      %376 = vmatpush2.msra.mxu0 0.0
      %377 = vmatprep.subr.mxu0 0.0
      %378 = vmatpush2.msra.mxu0 0.0
      %379 = vmatprep.subr.mxu0 0.0
      %380 = vmatpush2.msra.mxu0 0.0
      %381 = vmatprep.subr.mxu0 0.0
      %382 = vmatpush2.msra.mxu0 0.0
      %383 = vmatprep.subr.mxu0 0.0
      %384 = vmatpush2.msra.mxu0 0.0
      %385 = vmatprep.subr.mxu0 0.0
      %386 = vmatpush2.msra.mxu0 0.0
      %387 = vmatprep.subr.mxu0 0.0
      %388 = vmatpush2.msra.mxu0 0.0
      %389 = vmatprep.subr.mxu0 0.0
      %390 = vmatpush2.msra.mxu0 0.0
      %391 = vmatprep.subr.mxu0 0.0
      %392 = vmatpush2.msra.mxu0 0.0
      %393 = vmatprep.subr.mxu0 0.0
      %394 = vmatpush2.msra.mxu0 0.0
      %395 = vmatprep.mubr.f32.mxu0 0.0
      %396 = vmatmul.mubr.f32.gmra.mxu0 %v303
      %v397 = vpop.f32.mrf.mxu0
      %v398 = vadd.f32 0.0, %v397
      %v399 = vpop.f32.mrf.mxu0
      %v400 = vadd.f32 0.0, %v399
      %401 = vmatprep.mubr.f32.mxu0 0.0
      %402 = vmatmul.mubr.f32.gmra.mxu0 %v306
      %v403 = vpop.f32.mrf.mxu0
      %v404 = vadd.f32 0.0, %v403
      %v405 = vpop.f32.mrf.mxu0
      %v406 = vadd.f32 0.0, %v405
      %407 = vmatprep.mubr.f32.mxu0 0.0
      %408 = vmatmul.mubr.f32.gmra.mxu0 %v309
      %v409 = vpop.f32.mrf.mxu0
      %v410 = vadd.f32 0.0, %v409
      %v411 = vpop.f32.mrf.mxu0
      %v412 = vadd.f32 0.0, %v411
      %413 = vmatprep.mubr.f32.mxu0 0.0
      %414 = vmatmul.mubr.f32.gmra.mxu0 %v312
      %v415 = vpop.f32.mrf.mxu0
      %v416 = vadd.f32 0.0, %v415
      %v417 = vpop.f32.mrf.mxu0
      %v418 = vadd.f32 0.0, %v417
      %419 = vmatprep.mubr.f32.mxu0 0.0
      %420 = vmatmul.mubr.f32.gmra.mxu0 %v315
      %v421 = vpop.f32.mrf.mxu0
      %v422 = vadd.f32 0.0, %v421
      %v423 = vpop.f32.mrf.mxu0
      %v424 = vadd.f32 0.0, %v423
      %425 = vmatprep.mubr.f32.mxu0 0.0
      %426 = vmatmul.mubr.f32.gmra.mxu0 %v318
      %v427 = vpop.f32.mrf.mxu0
      %v428 = vadd.f32 0.0, %v427
      %v429 = vpop.f32.mrf.mxu0
      %v430 = vadd.f32 0.0, %v429
      %431 = vmatprep.mubr.f32.mxu0 0.0
      %432 = vmatmul.mubr.f32.gmra.mxu0 %v321
      %v433 = vpop.f32.mrf.mxu0
      %v434 = vadd.f32 0.0, %v433
      %v435 = vpop.f32.mrf.mxu0
      %v436 = vadd.f32 0.0, %v435
      %437 = vmatprep.mubr.f32.mxu0 0.0
      %438 = vmatmul.mubr.f32.gmra.mxu0 %v324
      %v439 = vpop.f32.mrf.mxu0
      %v440 = vadd.f32 0.0, %v439
      %v441 = vpop.f32.mrf.mxu0
      %v442 = vadd.f32 0.0, %v441
      %443 = vdwg.mxu0
      %v444 = vmul.f32 %v398, 2.0
      %v445 = vmul.f32 %v400, 2.0
      %v446 = vmul.f32 %v404, 2.0
      %v447 = vmul.f32 %v406, 2.0
      %v448 = vmul.f32 %v410, 2.0
      %v449 = vmul.f32 %v412, 2.0
      %v450 = vmul.f32 %v416, 2.0
      %v451 = vmul.f32 %v418, 2.0
      %v452 = vmul.f32 %v422, 2.0
      %v453 = vmul.f32 %v424, 2.0
      %v454 = vmul.f32 %v428, 2.0
      %v455 = vmul.f32 %v430, 2.0
      %v456 = vmul.f32 %v434, 2.0
      %v457 = vmul.f32 %v436, 2.0
      %v458 = vmul.f32 %v440, 2.0
      %v459 = vmul.f32 %v442, 2.0
      %461 = vset.pattern.permute.xlu0 0
      %462 = vperm.xlu0 %461, %v291
      %v463 = vpop.permute.xlu0 %462
      %466 = vset.pattern.permute.xlu0 0
      %467 = vperm.xlu0 %466, %v292
      %v468 = vpop.permute.xlu0 %467
      %471 = vset.pattern.permute.xlu0 0
      %472 = vperm.xlu0 %471, %v293
      %v473 = vpop.permute.xlu0 %472
      %476 = vset.pattern.permute.xlu0 0
      %477 = vperm.xlu0 %476, %v294
      %v478 = vpop.permute.xlu0 %477
      %481 = vset.pattern.permute.xlu0 0
      %482 = vperm.xlu0 %481, %v295
      %v483 = vpop.permute.xlu0 %482
      %486 = vset.pattern.permute.xlu0 0
      %487 = vperm.xlu0 %486, %v296
      %v488 = vpop.permute.xlu0 %487
      %491 = vset.pattern.permute.xlu0 0
      %492 = vperm.xlu0 %491, %v297
      %v493 = vpop.permute.xlu0 %492
      %496 = vset.pattern.permute.xlu0 0
      %497 = vperm.xlu0 %496, %v298
      %v498 = vpop.permute.xlu0 %497
      %v500 = vsub.f32 %v463, %v444
      %v501 = vsub.f32 %v463, %v445
      %v502 = vsub.f32 %v468, %v446
      %v503 = vsub.f32 %v468, %v447
      %v504 = vsub.f32 %v473, %v448
      %v505 = vsub.f32 %v473, %v449
      %v506 = vsub.f32 %v478, %v450
      %v507 = vsub.f32 %v478, %v451
      %v508 = vsub.f32 %v483, %v452
      %v509 = vsub.f32 %v483, %v453
      %v510 = vsub.f32 %v488, %v454
      %v511 = vsub.f32 %v488, %v455
      %v512 = vsub.f32 %v493, %v456
      %v513 = vsub.f32 %v493, %v457
      %v514 = vsub.f32 %v498, %v458
      %v515 = vsub.f32 %v498, %v459
      %v516 = vlaneseq
      %v517 = vshrl.u32 %v516, 7
      %v518 = vadd.s32 %v517, 8
      %v519 = vadd.s32 %v517, 16
      %v520 = vadd.s32 %v517, 24
      %v521 = vadd.s32 %v517, 32
      %v522 = vadd.s32 %v517, 40
      %v523 = vadd.s32 %v517, 48
      %v524 = vadd.s32 %v517, 56
      %v525 = vmin.f32 %v500, %v504
      %v526 = vmin.f32 %v502, %v506
      %v527 = vmin.f32 %v525, %v508
      %v528 = vmin.f32 %v526, %v510
      %v529 = vmin.f32 %v527, %v512
      %v530 = vmin.f32 %v528, %v514
      %v531 = vmin.f32 %v529, %v530
      %v532 = vrot.slane %v531, 4
      %v533 = vmin.f32 %v531, %v532
      %v534 = vrot.slane %v533, 2
      %v535 = vmin.f32 %v533, %v534
      %v536 = vrot.slane %v535, 1
      %v537 = vmin.f32 %v535, %v536
      %v538 = vmin.f32 %v501, %v505
      %v539 = vmin.f32 %v503, %v507
      %v540 = vmin.f32 %v538, %v509
      %v541 = vmin.f32 %v539, %v511
      %v542 = vmin.f32 %v540, %v513
      %v543 = vmin.f32 %v541, %v515
      %v544 = vmin.f32 %v542, %v543
      %v545 = vrot.slane %v544, 4
      %v546 = vmin.f32 %v544, %v545
      %v547 = vrot.slane %v546, 2
      %v548 = vmin.f32 %v546, %v547
      %v549 = vrot.slane %v548, 1
      %v550 = vmin.f32 %v548, %v549
      %vm551 = vcmp.le.f32.partialorder %v500, %v537
      %vm552 = vcmp.le.f32.partialorder %v501, %v550
      %vm553 = vcmp.le.f32.partialorder %v502, %v537
      %vm554 = vcmp.le.f32.partialorder %v503, %v550
      %vm555 = vcmp.le.f32.partialorder %v504, %v537
      %vm556 = vcmp.le.f32.partialorder %v505, %v550
      %vm557 = vcmp.le.f32.partialorder %v506, %v537
      %vm558 = vcmp.le.f32.partialorder %v507, %v550
      %vm559 = vcmp.le.f32.partialorder %v508, %v537
      %vm560 = vcmp.le.f32.partialorder %v509, %v550
      %vm561 = vcmp.le.f32.partialorder %v510, %v537
      %vm562 = vcmp.le.f32.partialorder %v511, %v550
      %vm563 = vcmp.le.f32.partialorder %v512, %v537
      %vm564 = vcmp.le.f32.partialorder %v513, %v550
      %vm565 = vcmp.le.f32.partialorder %v514, %v537
      %vm566 = vcmp.le.f32.partialorder %v515, %v550
      %v567 = vsel %vm551, %v517, 64
      %v568 = vsel %vm552, %v517, 64
      %v569 = vsel %vm553, %v518, 64
      %v570 = vsel %vm554, %v518, 64
      %v571 = vsel %vm555, %v519, 64
      %v572 = vsel %vm556, %v519, 64
      %v573 = vsel %vm557, %v520, 64
      %v574 = vsel %vm558, %v520, 64
      %v575 = vsel %vm559, %v521, 64
      %v576 = vsel %vm560, %v521, 64
      %v577 = vsel %vm561, %v522, 64
      %v578 = vsel %vm562, %v522, 64
      %v579 = vsel %vm563, %v523, 64
      %v580 = vsel %vm564, %v523, 64
      %v581 = vsel %vm565, %v524, 64
      %v582 = vsel %vm566, %v524, 64
      %vm583 = vcmp.lt.s32.totalorder %v567, %v571
      %v584 = vsel %vm583, %v567, %v571
      %vm585 = vcmp.lt.s32.totalorder %v569, %v573
      %v586 = vsel %vm585, %v569, %v573
      %vm587 = vcmp.lt.s32.totalorder %v584, %v575
      %v588 = vsel %vm587, %v584, %v575
      %vm589 = vcmp.lt.s32.totalorder %v586, %v577
      %v590 = vsel %vm589, %v586, %v577
      %vm591 = vcmp.lt.s32.totalorder %v588, %v579
      %v592 = vsel %vm591, %v588, %v579
      %vm593 = vcmp.lt.s32.totalorder %v590, %v581
      %v594 = vsel %vm593, %v590, %v581
      %vm595 = vcmp.lt.s32.totalorder %v592, %v594
      %v596 = vsel %vm595, %v592, %v594
      %v597 = vrot.slane %v596, 4
      %vm598 = vcmp.lt.s32.totalorder %v596, %v597
      %v599 = vsel %vm598, %v596, %v597
      %v600 = vrot.slane %v599, 2
      %vm601 = vcmp.lt.s32.totalorder %v599, %v600
      %v602 = vsel %vm601, %v599, %v600
      %v603 = vrot.slane %v602, 1
      %vm604 = vcmp.lt.s32.totalorder %v602, %v603
      %v605 = vsel %vm604, %v602, %v603
      %vm606 = vcmp.lt.s32.totalorder %v568, %v572
      %v607 = vsel %vm606, %v568, %v572
      %vm608 = vcmp.lt.s32.totalorder %v570, %v574
      %v609 = vsel %vm608, %v570, %v574
      %vm610 = vcmp.lt.s32.totalorder %v607, %v576
      %v611 = vsel %vm610, %v607, %v576
      %vm612 = vcmp.lt.s32.totalorder %v609, %v578
      %v613 = vsel %vm612, %v609, %v578
      %vm614 = vcmp.lt.s32.totalorder %v611, %v580
      %v615 = vsel %vm614, %v611, %v580
      %vm616 = vcmp.lt.s32.totalorder %v613, %v582
      %v617 = vsel %vm616, %v613, %v582
      %vm618 = vcmp.lt.s32.totalorder %v615, %v617
      %v619 = vsel %vm618, %v615, %v617
      %v620 = vrot.slane %v619, 4
      %vm621 = vcmp.lt.s32.totalorder %v619, %v620
      %v622 = vsel %vm621, %v619, %v620
      %v623 = vrot.slane %v622, 2
      %vm624 = vcmp.lt.s32.totalorder %v622, %v623
      %v625 = vsel %vm624, %v622, %v623
      %v626 = vrot.slane %v625, 1
      %vm627 = vcmp.lt.s32.totalorder %v625, %v626
      %v628 = vsel %vm627, %v625, %v626
      %vm629 = vcmp.eq.s32.totalorder %v517, %v605
      %vm630 = vcmp.eq.s32.totalorder %v517, %v628
      %vm631 = vcmp.eq.s32.totalorder %v518, %v605
      %vm632 = vcmp.eq.s32.totalorder %v518, %v628
      %vm633 = vcmp.eq.s32.totalorder %v519, %v605
      %vm634 = vcmp.eq.s32.totalorder %v519, %v628
      %vm635 = vcmp.eq.s32.totalorder %v520, %v605
      %vm636 = vcmp.eq.s32.totalorder %v520, %v628
      %vm637 = vcmp.eq.s32.totalorder %v521, %v605
      %vm638 = vcmp.eq.s32.totalorder %v521, %v628
      %vm639 = vcmp.eq.s32.totalorder %v522, %v605
      %vm640 = vcmp.eq.s32.totalorder %v522, %v628
      %vm641 = vcmp.eq.s32.totalorder %v523, %v605
      %vm642 = vcmp.eq.s32.totalorder %v523, %v628
      %vm643 = vcmp.eq.s32.totalorder %v524, %v605
      %vm644 = vcmp.eq.s32.totalorder %v524, %v628
      %v645 = vsel %vm629, 1, 0
      %v646 = vsel %vm630, 1, 0
      %v647 = vsel %vm631, 1, 0
      %v648 = vsel %vm632, 1, 0
      %v649 = vsel %vm633, 1, 0
      %v650 = vsel %vm634, 1, 0
      %v651 = vsel %vm635, 1, 0
      %v652 = vsel %vm636, 1, 0
      %v653 = vsel %vm637, 1, 0
      %v654 = vsel %vm638, 1, 0
      %v655 = vsel %vm639, 1, 0
      %v656 = vsel %vm640, 1, 0
      %v657 = vsel %vm641, 1, 0
      %v658 = vsel %vm642, 1, 0
      %v659 = vsel %vm643, 1, 0
      %v660 = vsel %vm644, 1, 0
      %v661 = vcvt.s32.f32 %v645
      %v662 = vcvt.s32.f32 %v646
      %v663 = vcvt.s32.f32 %v647
      %v664 = vcvt.s32.f32 %v648
      %v665 = vcvt.s32.f32 %v649
      %v666 = vcvt.s32.f32 %v650
      %v667 = vcvt.s32.f32 %v651
      %v668 = vcvt.s32.f32 %v652
      %v669 = vcvt.s32.f32 %v653
      %v670 = vcvt.s32.f32 %v654
      %v671 = vcvt.s32.f32 %v655
      %v672 = vcvt.s32.f32 %v656
      %v673 = vcvt.s32.f32 %v657
      %v674 = vcvt.s32.f32 %v658
      %v675 = vcvt.s32.f32 %v659
      %v676 = vcvt.s32.f32 %v660
      %vm677 = vcmask 523264
      %v679 = vsel %vm677, %v290, 0
      %681 = vmatprep.subr.mxu0 0.0
      %682 = vmatpush1.msra.mxu0 0.0
      %683 = vmatprep.subr.mxu0 0.0
      %684 = vmatpush1.msra.mxu0 0.0
      %685 = vmatprep.subr.mxu0 0.0
      %686 = vmatpush1.msra.mxu0 0.0
      %687 = vmatprep.subr.mxu0 0.0
      %688 = vmatpush1.msra.mxu0 0.0
      %689 = vmatprep.subr.mxu0 0.0
      %690 = vmatpush1.msra.mxu0 0.0
      %691 = vmatprep.subr.mxu0 0.0
      %692 = vmatpush1.msra.mxu0 0.0
      %693 = vmatprep.subr.mxu0 0.0
      %694 = vmatpush1.msra.mxu0 0.0
      %695 = vmatprep.subr.mxu0 0.0
      %696 = vmatpush1.msra.mxu0 0.0
      %697 = vmatprep.subr.mxu0 %v676
      %698 = vmatpush1.msra.mxu0 %v675
      %699 = vmatprep.subr.mxu0 %v674
      %700 = vmatpush1.msra.mxu0 %v673
      %701 = vmatprep.subr.mxu0 %v672
      %702 = vmatpush1.msra.mxu0 %v671
      %703 = vmatprep.subr.mxu0 %v670
      %704 = vmatpush1.msra.mxu0 %v669
      %705 = vmatprep.subr.mxu0 %v668
      %706 = vmatpush1.msra.mxu0 %v667
      %707 = vmatprep.subr.mxu0 %v666
      %708 = vmatpush1.msra.mxu0 %v665
      %709 = vmatprep.subr.mxu0 %v664
      %710 = vmatpush1.msra.mxu0 %v663
      %711 = vmatprep.subr.mxu0 %v662
      %712 = vmatpush1.msra.mxu0 %v661
      %713 = vmatprep.subr.mxu0 0.0
      %714 = vmatpush2.msra.mxu0 0.0
      %715 = vmatprep.subr.mxu0 0.0
      %716 = vmatpush2.msra.mxu0 0.0
      %717 = vmatprep.subr.mxu0 0.0
      %718 = vmatpush2.msra.mxu0 0.0
      %719 = vmatprep.subr.mxu0 0.0
      %720 = vmatpush2.msra.mxu0 0.0
      %721 = vmatprep.subr.mxu0 0.0
      %722 = vmatpush2.msra.mxu0 0.0
      %723 = vmatprep.subr.mxu0 0.0
      %724 = vmatpush2.msra.mxu0 0.0
      %725 = vmatprep.subr.mxu0 0.0
      %726 = vmatpush2.msra.mxu0 0.0
      %727 = vmatprep.subr.mxu0 0.0
      %728 = vmatpush2.msra.mxu0 0.0
      %729 = vmatprep.subr.mxu0 0.0
      %730 = vmatpush2.msra.mxu0 0.0
      %731 = vmatprep.subr.mxu0 0.0
      %732 = vmatpush2.msra.mxu0 0.0
      %733 = vmatprep.subr.mxu0 0.0
      %734 = vmatpush2.msra.mxu0 0.0
      %735 = vmatprep.subr.mxu0 0.0
      %736 = vmatpush2.msra.mxu0 0.0
      %737 = vmatprep.subr.mxu0 0.0
      %738 = vmatpush2.msra.mxu0 0.0
      %739 = vmatprep.subr.mxu0 0.0
      %740 = vmatpush2.msra.mxu0 0.0
      %741 = vmatprep.subr.mxu0 0.0
      %742 = vmatpush2.msra.mxu0 0.0
      %743 = vmatprep.subr.mxu0 0.0
      %744 = vmatpush2.msra.mxu0 0.0
      %745 = vmatprep.mubr.f32.mxu0 0.0
      %746 = vmatmul.mubr.f32.gmra.mxu0 %v679
      %v747 = vpop.f32.mrf.mxu0
      %v748 = vadd.f32 0.0, %v747
      %v749 = vpop.f32.mrf.mxu0
      %v750 = vadd.f32 0.0, %v749
      %751 = vdwg.mxu0
      %v754 = vcombine.low %v748, %v750
      %756 = vst [vmem:[%s273] sm:$0xff] %v754
      %v757 = vsub.f32 %v281, %v754
      %v758 = vmul.f32 %v757, %v757
      %v760 = vcombine.high %v758, %v758
      %v762 = vsel %vm326, %v758, 0.0
      %v763 = vsel %vm326, %v760, 0.0
      %v764 = vadd.f32 %v762, %v763
      %765 = vadd.xlane.f32.xlu0 %v764
      %v766 = vpop.xlane.xlu0 %765
      %v767 = vrot.slane %v766, 4
      %v768 = vadd.f32 %v766, %v767
      %v769 = vrot.slane %v768, 2
      %v770 = vadd.f32 %v768, %v769
      %v771 = vrot.slane %v770, 1
      %v772 = vadd.f32 %v770, %v771
      %s773 = vtos %v772
      %v774 = vlaneseq
      %v775 = vand.u32 %v774, 127
      %vm776 = vcmp.eq.s32.totalorder %v775, 0
      %v777 = vstv %s773
      %v778 = vsel %vm776, %v777, 0.0
      %779 = vst [vmem:[%s280] sm:$0x1] %v778
      %s780 = smul.u32 2, %s22
      %p781 = scmp.lt.s32.totalorder %s21, 1
      %s782 = scalar_select %p781, %s21, 1
      %p783 = scmp.lt.s32.totalorder %s780, 1
      %s784 = scalar_select %p783, %s780, 1
      %s785 = smul.addr %s782, 2
      %s786 = sadd.s32 %s784, %s785
      %s787 = smul.addr %s786, 4
      %s788 = scalar_lea.vmem %s4, %s787
      %p789 = scmp.lt.s32.totalorder %s21, 1
      %s790 = scalar_select %p789, %s21, 1
      %p791 = scmp.lt.s32.totalorder %s22, 0
      %s792 = scalar_select %p791, %s22, 0
      %s793 = sadd.s32 %s792, %s790
      %s794 = scalar_lea.vmem %s5, %s793
      // Predicated region
      $region37: #{vector_quantizer_forward.1} parent=35 // pred_check
        %p795 = pneg %p140
      $region38: #{vector_quantizer_forward.1} parent=35 // pred_check_branch
        %797 = sbr.rel (%p795) target = $region40
      $region39: #{vector_quantizer_forward.1} parent=35 // pred_region
        %s798 = smul.u32 2, %s22
      $region40: #{vector_quantizer_forward.1} parent=35 // pred_fallthru
        _
      // Predicated region
      $region41: #{vector_quantizer_forward.1} parent=35 // pred_check
        %p799 = pneg %p168
      $region42: #{vector_quantizer_forward.1} parent=35 // pred_check_branch
        %801 = sbr.rel (%p799) target = $region44
      $region43: #{vector_quantizer_forward.1} parent=35 // pred_region
        _
      $region44: #{vector_quantizer_forward.1} parent=35 // pred_fallthru
        _
    $region36: #{vector_quantizer_forward.1} parent=5 // pred_fallthru
      _
    %p802 = scmp.le.s32.totalorder 2, %s12
    // Predicated region
    $region45: #{vector_quantizer_forward.1} parent=5 // pred_check
      %p803 = pneg %p802
    $region46: #{vector_quantizer_forward.1} parent=5 // pred_check_branch
      %805 = sbr.rel (%p803) target = $region48
    $region47: #{vector_quantizer_forward.1} parent=5 // pred_region
      %s806 = ssub.s32 %s12, 2
      // Predicated region
      $region49: #{vector_quantizer_forward.1} parent=47 // pred_check
        %p807 = pneg %p146
      $region50: #{vector_quantizer_forward.1} parent=47 // pred_check_branch
        %809 = sbr.rel (%p807) target = $region52
      $region51: #{vector_quantizer_forward.1} parent=47 // pred_region
        %s810 = smul.u32 2, %s24
        %p811 = scmp.lt.s32.totalorder %s23, 1
        %s812 = scalar_select %p811, %s23, 1
        %p813 = scmp.lt.s32.totalorder %s810, 1
        %s814 = scalar_select %p813, %s810, 1
        %s815 = smul.addr %s812, 2
        %s816 = sadd.s32 %s814, %s815
        %s817 = smul.addr %s816, 4
        %s818 = scalar_lea.vmem %s4, %s817
      $region52: #{vector_quantizer_forward.1} parent=47 // pred_fallthru
        _
      // Predicated region
      $region53: #{vector_quantizer_forward.1} parent=47 // pred_check
        %p819 = pneg %p174
      $region54: #{vector_quantizer_forward.1} parent=47 // pred_check_branch
        %821 = sbr.rel (%p819) target = $region56
      $region55: #{vector_quantizer_forward.1} parent=47 // pred_region
        %p822 = scmp.lt.s32.totalorder %s23, 1
        %s823 = scalar_select %p822, %s23, 1
        %p824 = scmp.lt.s32.totalorder %s24, 0
        %s825 = scalar_select %p824, %s24, 0
        %s826 = sadd.s32 %s825, %s823
        %s827 = scalar_lea.vmem %s5, %s826
      $region56: #{vector_quantizer_forward.1} parent=47 // pred_fallthru
        _
    $region48: #{vector_quantizer_forward.1} parent=5 // pred_fallthru
      _
  $region6: #{vector_quantizer_forward.1} parent=0 // loop_footer
    %s16 = sadd.s32 1, %s12
  $region7: #{vector_quantizer_forward.1} parent=0 // loop_footer_branch
    %11 = sbr.rel target = $region3
  $region8: #{vector_quantizer_forward.1} parent=0 // loop_exit
    _

</llo_original>
